<compile_context>
chip_gen: v7x
topology: tpu7x:2x2x1
jax: 0.10.0
libtpu: 0.0.40
codegen_flags: <defaults>
</compile_context>

<pallas_src>
import jax
import jax.numpy as jnp
from jax import lax
from jax.experimental import pallas as pl
from jax.experimental.pallas import tpu as pltpu


def _cdiv(a, b):
    return -(-a // b)


def _round_up(a, b):
    return _cdiv(a, b) * b


def _vmem_limit_bytes():
    # Raise the scoped-VMEM limit above the default (16/32 MiB) so bigger
    # tiles are legal, but stay well under physical VMEM (64 MiB on v7x,
    # 128 MiB on v5e/v6e).
    try:
        cap = int(pltpu.get_tpu_info().vmem_capacity_bytes)
    except Exception:
        cap = 64 * 1024 * 1024  # conservative fallback: v7x per-core VMEM
    return min((cap * 3) // 4, 96 * 1024 * 1024)


def _pick_lane_chunk(tb, c, hw_pad, itemsize, max_chunk_bytes=64 * 1024):
    """Largest multiple of 128 that divides hw_pad and keeps the per-chunk
    vreg working set small (~16 vregs for x + 16 for the broadcast gate)."""
    units = hw_pad // 128
    best = 128
    for g in range(1, units + 1):
        if units % g == 0 and tb * c * g * 128 * itemsize <= max_chunk_bytes:
            best = g * 128
    return best


def _make_se_kernel(hw_true, lane_chunk, n_chunks):
    inv_hw = 1.0 / float(hw_true)  # divide by the TRUE spatial size (padding is zeros)
    unroll = n_chunks <= 8

    def kernel(x_ref, w1t_ref, w2t_ref, o_ref):
        tb, c, _ = x_ref.shape

        # ---- squeeze: global average pool over spatial (chunked over lanes) ----
        def sum_body(i, acc):
            off = pl.multiple_of(i * lane_chunk, lane_chunk)
            return acc + jnp.sum(x_ref[:, :, pl.ds(off, lane_chunk)], axis=-1)

        sums = lax.fori_loop(0, n_chunks, sum_body,
                             jnp.zeros((tb, c), jnp.float32), unroll=unroll)
        means = sums * inv_hw                                    # (TB, C)

        # ---- excitation: fc1 -> relu -> fc2 -> sigmoid (no in-kernel transposes) ----
        h = jnp.dot(means, w1t_ref[...], preferred_element_type=jnp.float32)
        h = jnp.maximum(h, 0.0)                                  # (TB, Cr)
        y = jnp.dot(h, w2t_ref[...], preferred_element_type=jnp.float32)
        gate = jax.nn.sigmoid(y)                                 # (TB, C)

        # Hoist the lane broadcast out of the scale loop (no per-iter broadcast).
        gate_b = jnp.broadcast_to(gate[:, :, None],
                                  (tb, c, lane_chunk)).astype(o_ref.dtype)

        # ---- scale: per-channel gate * x, chunked, lane-dense unmasked stores ----
        def scale_body(i, carry):
            off = pl.multiple_of(i * lane_chunk, lane_chunk)
            o_ref[:, :, pl.ds(off, lane_chunk)] = (
                x_ref[:, :, pl.ds(off, lane_chunk)] * gate_b)
            return carry

        lax.fori_loop(0, n_chunks, scale_body, 0, unroll=unroll)

    return kernel


def se_attention(x_nchw, w1, w2):
    """SEAttention forward: x * sigmoid(fc2(relu(fc1(mean_hw(x)))))."""
    b, c, h, w = x_nchw.shape
    cr = w1.shape[0]
    assert w1.shape == (cr, c) and w2.shape == (c, cr)

    hw = h * w
    hw_pad = _round_up(hw, 128)                  # lane-dense last dim
    itemsize = jnp.dtype(x_nchw.dtype).itemsize

    # --- VMEM budgeting: double-buffered input + output tiles must fit ---
    vmem_limit = _vmem_limit_bytes()
    tile_budget = max(vmem_limit - 16 * 1024 * 1024, 8 * 1024 * 1024)
    tile_bytes = c * hw_pad * itemsize           # one batch element, one buffer
    tb = max(1, tile_budget // (4 * tile_bytes))
    tb = min(tb, b)
    if b > 1:
        # keep >= 2 grid steps so v7x's two TensorCores both get work
        tb = min(tb, _cdiv(b, 2))
    grid_b = _cdiv(b, tb)
    b_pad = grid_b * tb
    # NOTE: for extreme single-tile sizes (e.g. C=512, HW>>3136) an additional
    # 'arbitrary' HW grid axis with a VMEM accumulator would be the next step.

    # --- layout plumbing in the wrapper (once, outside the grid loop) ---
    x = x_nchw.reshape(b, c, hw)
    if b_pad != b or hw_pad != hw:
        x = jnp.pad(x, ((0, b_pad - b), (0, 0), (0, hw_pad - hw)))
    w1t = jnp.transpose(w1)                      # (C, Cr)
    w2t = jnp.transpose(w2)                      # (Cr, C)

    lane_chunk = _pick_lane_chunk(tb, c, hw_pad, itemsize)
    n_chunks = hw_pad // lane_chunk
    kernel = _make_se_kernel(hw, lane_chunk, n_chunks)

    out = pl.pallas_call(
        kernel,
        out_shape=jax.ShapeDtypeStruct((b_pad, c, hw_pad), x.dtype),
        grid_spec=pltpu.PrefetchScalarGridSpec(
            num_scalar_prefetch=0,
            grid=(grid_b,),
            in_specs=[
                pl.BlockSpec((tb, c, hw_pad), lambda i: (i, 0, 0)),  # x block
                pl.BlockSpec((c, cr), lambda i: (0, 0)),             # fc1 weight (pre-T)
                pl.BlockSpec((cr, c), lambda i: (0, 0)),             # fc2 weight (pre-T)
            ],
            out_specs=pl.BlockSpec((tb, c, hw_pad), lambda i: (i, 0, 0)),
        ),
        compiler_params=pltpu.CompilerParams(
            dimension_semantics=("parallel",),
            vmem_limit_bytes=vmem_limit,
        ),
    )(x, w1t, w2t)

    return out[:b, :, :hw].reshape(b, c, h, w)


def se_attention_ref(x_nchw, w1, w2):
    # pure-JAX reference mirroring the PyTorch forward
    y = jnp.mean(x_nchw, axis=(2, 3))            # (b, c)
    y = jnp.maximum(y @ w1.T, 0.0)               # (b, c//r)
    y = jax.nn.sigmoid(y @ w2.T)                 # (b, c)
    return x_nchw * y[:, :, None, None]


def _run_case(key, b, c, h, w, reduction):
    cr = c // reduction
    kx, k1, k2 = jax.random.split(key, 3)
    x = jax.random.normal(kx, (b, c, h, w), dtype=jnp.float32)
    # deterministic Linear weights (no bias), std=0.001 like init_weights()
    w1 = 0.001 * jax.random.normal(k1, (cr, c), dtype=jnp.float32)   # fc1: (C//r, C)
    w2 = 0.001 * jax.random.normal(k2, (c, cr), dtype=jnp.float32)   # fc2: (C, C//r)

    out = jax.block_until_ready(se_attention(x, w1, w2))
    ref = se_attention_ref(x, w1, w2)
    assert out.shape == (b, c, h, w)
    assert jnp.allclose(out, ref, atol=1e-5, rtol=1e-5), "mismatch vs reference"


if __name__ == "__main__":
    key = jax.random.PRNGKey(0)
    k1, k2 = jax.random.split(key)
    # channel=32, reduction=8; HW=256 is already lane-dense
    _run_case(k1, b=2, c=32, h=16, w=16, reduction=8)
    # non-128-multiple spatial (7x7 -> padded to 128 lanes) + odd batch (padded)
    _run_case(k2, b=3, c=32, h=7, w=7, reduction=8)
    print("KERNEL_OK")
</pallas_src>

<mosaic_0001>
module attributes {stable_mosaic.version = 11 : i64} {
  func.func @kernel(%arg0: i32, %arg1: memref<1x32x256xf32, #tpu.memory_space<vmem>>, %arg2: memref<32x4xf32, #tpu.memory_space<vmem>>, %arg3: memref<4x32xf32, #tpu.memory_space<vmem>>, %arg4: memref<1x32x256xf32, #tpu.memory_space<vmem>>) attributes {dimension_semantics = [#tpu.dimension_semantics<parallel>], iteration_bounds = array<i64: 2>, scalar_prefetch = 0 : i64, scratch_operands = 0 : i64, tpu.core_type = #tpu.core_type<tc>, window_params = [{transform_indices = @transform_0, window_bounds = array<i64: 1, 32, 256>}, {pipeline_mode = #tpu.pipeline_mode<synchronous>, transform_indices = @transform_1, window_bounds = array<i64: 32, 4>}, {pipeline_mode = #tpu.pipeline_mode<synchronous>, transform_indices = @transform_2, window_bounds = array<i64: 4, 32>}, {transform_indices = @transform_3, window_bounds = array<i64: 1, 32, 256>}]} {
    %cst = arith.constant 0.000000e+00 : f32
    %0 = vector.broadcast %cst : f32 to vector<1x32xf32>
    %c0_i32 = arith.constant 0 : i32
    %c256_i32 = arith.constant 256 : i32
    %1 = arith.muli %c0_i32, %c256_i32 : i32
    %2 = tpu.assume_multiple %1, 256 : i32
    %c0 = arith.constant 0 : index
    %c0_0 = arith.constant 0 : index
    %3 = arith.index_cast %2 : i32 to index
    %4 = vector.load %arg1[%c0, %c0_0, %3] : memref<1x32x256xf32, #tpu.memory_space<vmem>>, vector<1x32x256xf32>
    %cst_1 = arith.constant dense<0.000000e+00> : vector<1x32xf32>
    %5 = vector.multi_reduction <add>, %4, %cst_1 [2] : vector<1x32x256xf32> to vector<1x32xf32>
    %6 = arith.addf %0, %5 : vector<1x32xf32>
    %c1_i32 = arith.constant 1 : i32
    %cst_2 = arith.constant 3.906250e-03 : f32
    %7 = vector.broadcast %cst_2 : f32 to vector<1x32xf32>
    %8 = arith.mulf %6, %7 : vector<1x32xf32>
    %c0_3 = arith.constant 0 : index
    %c0_4 = arith.constant 0 : index
    %9 = vector.load %arg2[%c0_3, %c0_4] : memref<32x4xf32, #tpu.memory_space<vmem>>, vector<32x4xf32>
    %cst_5 = arith.constant dense<0.000000e+00> : vector<1x4xf32>
    %10 = tpu.matmul %8, %9, %cst_5 {dimension_numbers = #tpu.dot_dimension_numbers<[1], [0], [0], [1], [0, 0, 1, 1], [], []>} : vector<1x32xf32>, vector<32x4xf32>, vector<1x4xf32> -> vector<1x4xf32>
    %cst_6 = arith.constant 0.000000e+00 : f32
    %11 = vector.broadcast %cst_6 : f32 to vector<1x4xf32>
    %12 = arith.maximumf %10, %11 : vector<1x4xf32>
    %c0_7 = arith.constant 0 : index
    %c0_8 = arith.constant 0 : index
    %13 = vector.load %arg3[%c0_7, %c0_8] : memref<4x32xf32, #tpu.memory_space<vmem>>, vector<4x32xf32>
    %cst_9 = arith.constant dense<0.000000e+00> : vector<1x32xf32>
    %14 = tpu.matmul %12, %13, %cst_9 {dimension_numbers = #tpu.dot_dimension_numbers<[1], [0], [0], [1], [0, 0, 1, 1], [], []>} : vector<1x4xf32>, vector<4x32xf32>, vector<1x32xf32> -> vector<1x32xf32>
    %15 = arith.negf %14 : vector<1x32xf32>
    %16 = math.exp %15 : vector<1x32xf32>
    %cst_10 = arith.constant 1.000000e+00 : f32
    %17 = vector.broadcast %cst_10 : f32 to vector<1x32xf32>
    %18 = arith.addf %17, %16 : vector<1x32xf32>
    %19 = arith.divf %17, %18 : vector<1x32xf32>
    %20 = vector.shape_cast %19 : vector<1x32xf32> to vector<1x32x1xf32>
    %21 = vector.shape_cast %20 : vector<1x32x1xf32> to vector<1x32x1xf32>
    %22 = vector.broadcast %21 : vector<1x32x1xf32> to vector<1x32x256xf32>
    %c0_i32_11 = arith.constant 0 : i32
    %c256_i32_12 = arith.constant 256 : i32
    %23 = arith.muli %c0_i32_11, %c256_i32_12 : i32
    %24 = tpu.assume_multiple %23, 256 : i32
    %c0_13 = arith.constant 0 : index
    %c0_14 = arith.constant 0 : index
    %25 = arith.index_cast %24 : i32 to index
    %26 = vector.load %arg1[%c0_13, %c0_14, %25] : memref<1x32x256xf32, #tpu.memory_space<vmem>>, vector<1x32x256xf32>
    %27 = arith.mulf %26, %22 : vector<1x32x256xf32>
    %c0_15 = arith.constant 0 : index
    %c0_16 = arith.constant 0 : index
    %28 = arith.index_cast %24 : i32 to index
    %29 = vector.load %arg4[%c0_15, %c0_16, %28] : memref<1x32x256xf32, #tpu.memory_space<vmem>>, vector<1x32x256xf32>
    tpu.vector_store %arg4[%c0_15, %c0_16, %28], %27 {strides = array<i32>} : memref<1x32x256xf32, #tpu.memory_space<vmem>>, vector<1x32x256xf32>,
    %c1_i32_17 = arith.constant 1 : i32
    return
  }
  func.func @transform_0(%arg0: i32) -> (i32, i32, i32) {
    %c0_i32 = arith.constant 0 : i32
    %c0_i32_0 = arith.constant 0 : i32
    %c0_i32_1 = arith.constant 0 : i32
    return %arg0, %c0_i32, %c0_i32_0 : i32, i32, i32
  }
  func.func @transform_1(%arg0: i32) -> (i32, i32) {
    %c0_i32 = arith.constant 0 : i32
    %c0_i32_0 = arith.constant 0 : i32
    %c0_i32_1 = arith.constant 0 : i32
    return %c0_i32, %c0_i32_0 : i32, i32
  }
  func.func @transform_2(%arg0: i32) -> (i32, i32) {
    %c0_i32 = arith.constant 0 : i32
    %c0_i32_0 = arith.constant 0 : i32
    %c0_i32_1 = arith.constant 0 : i32
    return %c0_i32, %c0_i32_0 : i32, i32
  }
  func.func @transform_3(%arg0: i32) -> (i32, i32, i32) {
    %c0_i32 = arith.constant 0 : i32
    %c0_i32_0 = arith.constant 0 : i32
    %c0_i32_1 = arith.constant 0 : i32
    return %arg0, %c0_i32, %c0_i32_0 : i32, i32, i32
  }
}

</mosaic_0001>

<llo_original>
// kernel: tpu_custom_call.1
$region0: #{tpu_custom_call.1}
  #allocation0 [shape = 'u32[]', space=smem, size = 0x4, offset = 0x4, fixed_abs, tag = 'smem constant byte address 0x4 - core index']
  #allocation1 [shape = 'u32[144,128]{1,0:T(1,128)}', space=vmem, size = 0x12000, scoped, tag = 'internal scratch']
  %s0 = inlined_call_operand.hbm [shape: f32[2,32,256], index: 0, kind: input, shape index: {}]
  %s1 = inlined_call_operand.vmem [shape: f32[32,4], index: 1, kind: input, shape index: {}]
  %s2 = inlined_call_operand.vmem [shape: f32[4,32], index: 2, kind: input, shape index: {}]
  %s3 = inlined_call_operand.hbm [shape: f32[2,32,256], index: 3, kind: output, shape index: {}]
  %s4 = sld [smem:[#allocation0]]
  $region49: #{tpu_custom_call.1} parent=0
    _
  %s6 = ssub.s32 1, %s4
  %s7 = scalar_select 0, %s6, %s4
  $region1: #{tpu_custom_call.1} parent=0
    #allocation2 [shape = 'u8[65536]{0}', space=vmem, size = 0x10000, scoped, tag = 'input window, operand 0']
    #allocation3 [shape = 's32[2]{0}', space=sflag, size = 0x8, scoped, tag = 'scoped memory for tpu_custom_call.1']
    #allocation4 [shape = 's32[2]{0}', space=sflag, size = 0x8, scoped, tag = 'scoped memory for tpu_custom_call.1']
    #allocation5 [shape = 'u8[65536]{0}', space=vmem, size = 0x10000, scoped, tag = 'output window, operand 0']
    %8 = vsyncpa [#allocation3], 0
    %s9 = scalar_lea.sflag [#allocation3], 1
    %10 = vsyncpa %s9, 0
    %11 = vsyncpa [#allocation4], 0
    %s12 = scalar_lea.sflag [#allocation4], 1
    %13 = vsyncpa %s12, 0
    loop: start=0, step=1, limit=4
    $region2: #{tpu_custom_call.1} parent=1 // loop_pre_header
      _
    $region3: #{tpu_custom_call.1} parent=1 // loop_header
      %s15 = sphi 0, %s19
      %p16 = scmp.ge.s32.totalorder %s15, 4
      %s25 = sphi 0, %s27
      %s28 = sphi 0, %s25
      %s29 = sphi 0, %s28
      %s45 = sphi 0, %s29
      %s49 = sphi 0, %s49
      %s51 = sphi 0, %s49
      %s52 = sphi 0, %s51
      %s66 = sphi 0, %s52
      %s70 = sphi 0, %s70
      %s72 = sphi 0, %s70
      %s73 = sphi 0, %s72
      %s87 = sphi 0, %s73
      %s93 = sphi 0, %s95
      %s96 = sphi 0, %s93
      %s97 = sphi 0, %s96
      %s113 = sphi 0, %s97
    $region4: #{tpu_custom_call.1} parent=1 // loop_header_branch
      %18 = sbr.rel (%p16) target = $region8
    $region5: #{tpu_custom_call.1} parent=1 // loop_body
      %s20 = ssub.s32 %s15, 1
      %s21 = ssub.s32 %s15, 2
      %s22 = sadd.s32 %s15, 1
      %s23 = ssub.s32 %s15, %s22
      %p24 = scmp.eq.s32.totalorder %s23, 0
      %s26 = sadd.s32 %s25, 1
      %s27 = scalar_select %p24, %s25, %s26
      %p30 = pneg %p24
      %p31 = scmp.eq.s32.totalorder %s15, 1
      %p32 = por %p30, %p31
      %p33 = scmp.ne.s32.totalorder %s25, %s28
      %p34 = scmp.eq.s32.totalorder %s15, 0
      %p35 = por %p33, %p34
      %p36 = scmp.ne.s32.totalorder %s25, %s28
      %p37 = scmp.eq.s32.totalorder %s20, 1
      %p38 = por %p36, %p37
      %p39 = scmp.ne.s32.totalorder %s28, %s29
      %p40 = scmp.eq.s32.totalorder %s20, 0
      %p41 = por %p39, %p40
      %p42 = scmp.ne.s32.totalorder %s28, %s29
      %p43 = scmp.eq.s32.totalorder %s21, 1
      %p44 = por %p42, %p43
      %p46 = scmp.ne.s32.totalorder %s29, %s45
      %p47 = scmp.eq.s32.totalorder %s21, 0
      %p48 = por %p46, %p47
      %s50 = sadd.s32 %s49, 1
      %p53 = scmp.eq.s32.totalorder %s15, 1
      %p54 = scmp.ne.s32.totalorder %s49, %s51
      %p55 = scmp.eq.s32.totalorder %s15, 0
      %p56 = por %p54, %p55
      %p57 = scmp.ne.s32.totalorder %s49, %s51
      %p58 = scmp.eq.s32.totalorder %s20, 1
      %p59 = por %p57, %p58
      %p60 = scmp.ne.s32.totalorder %s51, %s52
      %p61 = scmp.eq.s32.totalorder %s20, 0
      %p62 = por %p60, %p61
      %p63 = scmp.ne.s32.totalorder %s51, %s52
      %p64 = scmp.eq.s32.totalorder %s21, 1
      %p65 = por %p63, %p64
      %p67 = scmp.ne.s32.totalorder %s52, %s66
      %p68 = scmp.eq.s32.totalorder %s21, 0
      %p69 = por %p67, %p68
      %s71 = sadd.s32 %s70, 1
      %p74 = scmp.eq.s32.totalorder %s15, 1
      %p75 = scmp.ne.s32.totalorder %s70, %s72
      %p76 = scmp.eq.s32.totalorder %s15, 0
      %p77 = por %p75, %p76
      %p78 = scmp.ne.s32.totalorder %s70, %s72
      %p79 = scmp.eq.s32.totalorder %s20, 1
      %p80 = por %p78, %p79
      %p81 = scmp.ne.s32.totalorder %s72, %s73
      %p82 = scmp.eq.s32.totalorder %s20, 0
      %p83 = por %p81, %p82
      %p84 = scmp.ne.s32.totalorder %s72, %s73
      %p85 = scmp.eq.s32.totalorder %s21, 1
      %p86 = por %p84, %p85
      %p88 = scmp.ne.s32.totalorder %s73, %s87
      %p89 = scmp.eq.s32.totalorder %s21, 0
      %p90 = por %p88, %p89
      %s91 = ssub.s32 %s15, %s22
      %p92 = scmp.eq.s32.totalorder %s91, 0
      %s94 = sadd.s32 %s93, 1
      %s95 = scalar_select %p92, %s93, %s94
      %p98 = pneg %p92
      %p99 = scmp.eq.s32.totalorder %s15, 1
      %p100 = por %p98, %p99
      %p101 = scmp.ne.s32.totalorder %s93, %s96
      %p102 = scmp.eq.s32.totalorder %s15, 0
      %p103 = por %p101, %p102
      %p104 = scmp.ne.s32.totalorder %s93, %s96
      %p105 = scmp.eq.s32.totalorder %s20, 1
      %p106 = por %p104, %p105
      %p107 = scmp.ne.s32.totalorder %s96, %s97
      %p108 = scmp.eq.s32.totalorder %s20, 0
      %p109 = por %p107, %p108
      %p110 = scmp.ne.s32.totalorder %s96, %s97
      %p111 = scmp.eq.s32.totalorder %s21, 1
      %p112 = por %p110, %p111
      %p114 = scmp.ne.s32.totalorder %s97, %s113
      %p115 = scmp.eq.s32.totalorder %s21, 0
      %p116 = por %p114, %p115
      %p117 = scmp.le.s32.totalorder 1, %s15
      %p118 = scmp.lt.s32.totalorder %s15, 3
      %p119 = pnand %p117, %p118
      %p120 = pneg %p119
      // Predicated region
      $region9: #{tpu_custom_call.1} parent=5 // pred_check
        _
      $region10: #{tpu_custom_call.1} parent=5 // pred_check_branch
        %122 = sbr.rel (%p119) target = $region12
      $region11: #{tpu_custom_call.1} parent=5 // pred_region
        %s123 = ssub.s32 %s15, 1
        // Predicated region
        $region13: #{tpu_custom_call.1} parent=11 // pred_check
          %p124 = pneg %p62
        $region14: #{tpu_custom_call.1} parent=11 // pred_check_branch
          %126 = sbr.rel (%p124) target = $region16
        $region15: #{tpu_custom_call.1} parent=11 // pred_region
          _
        $region16: #{tpu_custom_call.1} parent=11 // pred_fallthru
          _
        // Predicated region
        $region17: #{tpu_custom_call.1} parent=11 // pred_check
          %p127 = pneg %p83
        $region18: #{tpu_custom_call.1} parent=11 // pred_check_branch
          %129 = sbr.rel (%p127) target = $region20
        $region19: #{tpu_custom_call.1} parent=11 // pred_region
          _
        $region20: #{tpu_custom_call.1} parent=11 // pred_fallthru
          _
      $region12: #{tpu_custom_call.1} parent=5 // pred_fallthru
        _
      %p130 = scmp.lt.s32.totalorder %s15, 2
      // Predicated region
      $region21: #{tpu_custom_call.1} parent=5 // pred_check
        %p131 = pneg %p130
      $region22: #{tpu_custom_call.1} parent=5 // pred_check_branch
        %133 = sbr.rel (%p131) target = $region24
      $region23: #{tpu_custom_call.1} parent=5 // pred_region
        // Predicated region
        $region25: #{tpu_custom_call.1} parent=23 // pred_check
          %p134 = pneg %p35
        $region26: #{tpu_custom_call.1} parent=23 // pred_check_branch
          %136 = sbr.rel (%p134) target = $region28
        $region27: #{tpu_custom_call.1} parent=23 // pred_region
          %s137 = sand.u32 %s25, 1
          %s138 = scalar_lea.sflag [#allocation3], %s137
          %s139 = sand.u32 %s25, 1
          %s140 = smul.addr %s139, 64
          %s141 = scalar_lea.vmem [#allocation2], %s140
          %s143 = ssub.s32 1024, 1024
          %144 = vsyncadd %s138, %s143
          %s145 = smul.addr %s15, 8
          %s146 = smul.addr %s145, 128
          %s147 = scalar_lea.hbm %s0, %s146
          %s148 = sshll.u32 %s141, 4
          %s149 = int_to_ptr.vmem [resolvable:$true] %s148
          %154 = dma.hbm_to_vmem [thread:$0]  %s147, 1024, %s149, %s138, 256, 256, 16
        $region28: #{tpu_custom_call.1} parent=23 // pred_fallthru
          _
      $region24: #{tpu_custom_call.1} parent=5 // pred_fallthru
        _
      %p155 = scmp.le.s32.totalorder 1, %s15
      %p156 = scmp.lt.s32.totalorder %s15, 3
      %p157 = pnand %p155, %p156
      %p158 = pneg %p157
      // Predicated region
      $region29: #{tpu_custom_call.1} parent=5 // pred_check
        _
      $region30: #{tpu_custom_call.1} parent=5 // pred_check_branch
        %160 = sbr.rel (%p157) target = $region32
      $region31: #{tpu_custom_call.1} parent=5 // pred_region
        %s161 = ssub.s32 %s15, 1
        %s162 = sand.u32 %s28, 1
        %s163 = scalar_lea.sflag [#allocation3], %s162
        %s164 = sand.u32 %s28, 1
        %s165 = smul.addr %s164, 64
        %s166 = scalar_lea.vmem [#allocation2], %s165
        // Predicated region
        $region33: #{tpu_custom_call.1} parent=31 // pred_check
          %p167 = pneg %p41
        $region34: #{tpu_custom_call.1} parent=31 // pred_check_branch
          %169 = sbr.rel (%p167) target = $region36
        $region35: #{tpu_custom_call.1} parent=31 // pred_region
          %170 = dma.done %s163, 1024
        $region36: #{tpu_custom_call.1} parent=31 // pred_fallthru
          _
        %s171 = sand.u32 %s28, 1
        %s172 = scalar_lea.sflag [#allocation3], %s171
        %s173 = sand.u32 %s28, 1
        %s174 = smul.addr %s173, 64
        %s175 = scalar_lea.vmem [#allocation2], %s174
        %p176 = pneg %p41
        %p177 = pneg %p38
        %p178 = pneg %p62
        %p179 = pneg %p59
        %p180 = pneg %p83
        %p181 = pneg %p80
        %p182 = pneg %p109
        %p183 = pneg %p106
        %s184 = sand.u32 %s96, 1
        %s185 = scalar_lea.sflag [#allocation4], %s184
        %s186 = sand.u32 %s96, 1
        %s187 = smul.addr %s186, 64
        %s188 = scalar_lea.vmem [#allocation5], %s187
        %v189 = vld [vmem:[%s166] sm:$0xff]
        %v190 = vld [vmem:[%s166 + $0x8] sm:$0xff]
        %v191 = vld [vmem:[%s166 + $0x10] sm:$0xff]
        %v192 = vld [vmem:[%s166 + $0x18] sm:$0xff]
        %v193 = vld [vmem:[%s166 + $0x20] sm:$0xff]
        %v194 = vld [vmem:[%s166 + $0x28] sm:$0xff]
        %v195 = vld [vmem:[%s166 + $0x30] sm:$0xff]
        %v196 = vld [vmem:[%s166 + $0x38] sm:$0xff]
        %v197 = vadd.f32 %v189, %v190
        %198 = vadd.xlane.f32.xlu0 %v197
        %v199 = vpop.xlane.xlu0 %198
        %v200 = vadd.f32 %v191, %v192
        %201 = vadd.xlane.f32.xlu0 %v200
        %v202 = vpop.xlane.xlu0 %201
        %v203 = vadd.f32 %v193, %v194
        %204 = vadd.xlane.f32.xlu0 %v203
        %v205 = vpop.xlane.xlu0 %204
        %v206 = vadd.f32 %v195, %v196
        %207 = vadd.xlane.f32.xlu0 %v206
        %v208 = vpop.xlane.xlu0 %207
        %v209 = vadd.f32 %v199, 0.0
        %v210 = vadd.f32 %v202, 0.0
        %v211 = vadd.f32 %v205, 0.0
        %v212 = vadd.f32 %v208, 0.0
        %v213 = vmul.f32 %v209, 0.00390625
        %v214 = vmul.f32 %v210, 0.00390625
        %v215 = vmul.f32 %v211, 0.00390625
        %v216 = vmul.f32 %v212, 0.00390625
        %v217 = vld [vmem:[%s1] sm:$0xff]
        %v218 = vld [vmem:[%s1 + $0x8] sm:$0xff]
        %v219 = vld [vmem:[%s1 + $0x10] sm:$0xff]
        %v220 = vld [vmem:[%s1 + $0x18] sm:$0xff]
        %v225 = vlaneseq
        %v226 = vand.u32 %v225, 127
        %v227 = vlaneseq
        %v228 = vshrl.u32 %v227, 7
        %v229 = vsub.s32 %v226, %v228
        %v230 = vrot.slane %v213, %v229
        %v231 = vadd.s32 %v226, 4294967288
        %v232 = vlaneseq
        %v233 = vshrl.u32 %v232, 7
        %v234 = vsub.s32 %v231, %v233
        %v235 = vrot.slane %v214, %v234
        %vm236 = vcmask 130112
        %v237 = vsel %vm236, %v235, %v230
        %v238 = vadd.s32 %v226, 4294967280
        %v239 = vlaneseq
        %v240 = vshrl.u32 %v239, 7
        %v241 = vsub.s32 %v238, %v240
        %v242 = vrot.slane %v215, %v241
        %vm243 = vcmask 195712
        %v244 = vsel %vm243, %v242, %v237
        %v245 = vadd.s32 %v226, 4294967272
        %v246 = vlaneseq
        %v247 = vshrl.u32 %v246, 7
        %v248 = vsub.s32 %v245, %v247
        %v249 = vrot.slane %v216, %v248
        %vm250 = vcmask 261312
        %v251 = vsel %vm250, %v249, %v244
        %vm252 = vcmask 261120
        %v253 = vsel %vm252, %v251, 0
        %255 = vmatprep.subr.mxu0 0.0
        %256 = vmatpush1.msra.mxu0 %v217
        %257 = vmatprep.subr.mxu0 0.0
        %258 = vmatpush1.msra.mxu0 %v218
        %259 = vmatprep.subr.mxu0 0.0
        %260 = vmatpush1.msra.mxu0 %v219
        %261 = vmatprep.subr.mxu0 0.0
        %262 = vmatpush1.msra.mxu0 %v220
        %263 = vmatprep.subr.mxu0 0.0
        %264 = vmatpush1.msra.mxu0 0.0
        %265 = vmatprep.subr.mxu0 0.0
        %266 = vmatpush1.msra.mxu0 0.0
        %267 = vmatprep.subr.mxu0 0.0
        %268 = vmatpush1.msra.mxu0 0.0
        %269 = vmatprep.subr.mxu0 0.0
        %270 = vmatpush1.msra.mxu0 0.0
        %271 = vmatprep.subr.mxu0 0.0
        %272 = vmatpush1.msra.mxu0 0.0
        %273 = vmatprep.subr.mxu0 0.0
        %274 = vmatpush1.msra.mxu0 0.0
        %275 = vmatprep.subr.mxu0 0.0
        %276 = vmatpush1.msra.mxu0 0.0
        %277 = vmatprep.subr.mxu0 0.0
        %278 = vmatpush1.msra.mxu0 0.0
        %279 = vmatprep.subr.mxu0 0.0
        %280 = vmatpush1.msra.mxu0 0.0
        %281 = vmatprep.subr.mxu0 0.0
        %282 = vmatpush1.msra.mxu0 0.0
        %283 = vmatprep.subr.mxu0 0.0
        %284 = vmatpush1.msra.mxu0 0.0
        %285 = vmatprep.subr.mxu0 0.0
        %286 = vmatpush1.msra.mxu0 0.0
        %287 = vmatprep.subr.mxu0 0.0
        %288 = vmatpush1.msra.mxu0 0.0
        %289 = vmatprep.subr.mxu0 0.0
        %290 = vmatpush1.msra.mxu0 0.0
        %291 = vmatprep.subr.mxu0 0.0
        %292 = vmatpush1.msra.mxu0 0.0
        %293 = vmatprep.subr.mxu0 0.0
        %294 = vmatpush1.msra.mxu0 0.0
        %295 = vmatprep.subr.mxu0 0.0
        %296 = vmatpush1.msra.mxu0 0.0
        %297 = vmatprep.subr.mxu0 0.0
        %298 = vmatpush1.msra.mxu0 0.0
        %299 = vmatprep.subr.mxu0 0.0
        %300 = vmatpush1.msra.mxu0 0.0
        %301 = vmatprep.subr.mxu0 0.0
        %302 = vmatpush1.msra.mxu0 0.0
        %303 = vmatprep.subr.mxu0 0.0
        %304 = vmatpush1.msra.mxu0 0.0
        %305 = vmatprep.subr.mxu0 0.0
        %306 = vmatpush1.msra.mxu0 0.0
        %307 = vmatprep.subr.mxu0 0.0
        %308 = vmatpush1.msra.mxu0 0.0
        %309 = vmatprep.subr.mxu0 0.0
        %310 = vmatpush1.msra.mxu0 0.0
        %311 = vmatprep.subr.mxu0 0.0
        %312 = vmatpush1.msra.mxu0 0.0
        %313 = vmatprep.subr.mxu0 0.0
        %314 = vmatpush1.msra.mxu0 0.0
        %315 = vmatprep.subr.mxu0 0.0
        %316 = vmatpush1.msra.mxu0 0.0
        %317 = vmatprep.subr.mxu0 0.0
        %318 = vmatpush1.msra.mxu0 0.0
        %319 = vmatprep.mubr.f32.mxu0 0.0
        %320 = vmatmul.mubr.f32.gmra.mrb[0].mxu0 %v253
        %v321 = vpop.f32.mrb[0].mxu0
        %v322 = vadd.f32 0.0, %v321
        %v323 = vpop.f32.mrb[0].mxu0
        %324 = vdwg.mxu0
        %v325 = vmax.f32 %v322, 0.0
        %v326 = vld [vmem:[%s2] sm:$0xf]
        %vm327 = vcmask 31744
        %v329 = vsel %vm327, %v325, 0
        %vm331 = vcmask 1043456
        %v333 = vsel %vm331, %v326, 0
        %335 = vmatprep.subr.mxu0 0.0
        %336 = vmatpush1.msra.mxu0 %v333
        %337 = vmatprep.subr.mxu0 0.0
        %338 = vmatpush1.msra.mxu0 0.0
        %339 = vmatprep.subr.mxu0 0.0
        %340 = vmatpush1.msra.mxu0 0.0
        %341 = vmatprep.subr.mxu0 0.0
        %342 = vmatpush1.msra.mxu0 0.0
        %343 = vmatprep.subr.mxu0 0.0
        %344 = vmatpush1.msra.mxu0 0.0
        %345 = vmatprep.subr.mxu0 0.0
        %346 = vmatpush1.msra.mxu0 0.0
        %347 = vmatprep.subr.mxu0 0.0
        %348 = vmatpush1.msra.mxu0 0.0
        %349 = vmatprep.subr.mxu0 0.0
        %350 = vmatpush1.msra.mxu0 0.0
        %351 = vmatprep.subr.mxu0 0.0
        %352 = vmatpush1.msra.mxu0 0.0
        %353 = vmatprep.subr.mxu0 0.0
        %354 = vmatpush1.msra.mxu0 0.0
        %355 = vmatprep.subr.mxu0 0.0
        %356 = vmatpush1.msra.mxu0 0.0
        %357 = vmatprep.subr.mxu0 0.0
        %358 = vmatpush1.msra.mxu0 0.0
        %359 = vmatprep.subr.mxu0 0.0
        %360 = vmatpush1.msra.mxu0 0.0
        %361 = vmatprep.subr.mxu0 0.0
        %362 = vmatpush1.msra.mxu0 0.0
        %363 = vmatprep.subr.mxu0 0.0
        %364 = vmatpush1.msra.mxu0 0.0
        %365 = vmatprep.subr.mxu0 0.0
        %366 = vmatpush1.msra.mxu0 0.0
        %367 = vmatprep.subr.mxu0 0.0
        %368 = vmatpush1.msra.mxu0 0.0
        %369 = vmatprep.subr.mxu0 0.0
        %370 = vmatpush1.msra.mxu0 0.0
        %371 = vmatprep.subr.mxu0 0.0
        %372 = vmatpush1.msra.mxu0 0.0
        %373 = vmatprep.subr.mxu0 0.0
        %374 = vmatpush1.msra.mxu0 0.0
        %375 = vmatprep.subr.mxu0 0.0
        %376 = vmatpush1.msra.mxu0 0.0
        %377 = vmatprep.subr.mxu0 0.0
        %378 = vmatpush1.msra.mxu0 0.0
        %379 = vmatprep.subr.mxu0 0.0
        %380 = vmatpush1.msra.mxu0 0.0
        %381 = vmatprep.subr.mxu0 0.0
        %382 = vmatpush1.msra.mxu0 0.0
        %383 = vmatprep.subr.mxu0 0.0
        %384 = vmatpush1.msra.mxu0 0.0
        %385 = vmatprep.subr.mxu0 0.0
        %386 = vmatpush1.msra.mxu0 0.0
        %387 = vmatprep.subr.mxu0 0.0
        %388 = vmatpush1.msra.mxu0 0.0
        %389 = vmatprep.subr.mxu0 0.0
        %390 = vmatpush1.msra.mxu0 0.0
        %391 = vmatprep.subr.mxu0 0.0
        %392 = vmatpush1.msra.mxu0 0.0
        %393 = vmatprep.subr.mxu0 0.0
        %394 = vmatpush1.msra.mxu0 0.0
        %395 = vmatprep.subr.mxu0 0.0
        %396 = vmatpush1.msra.mxu0 0.0
        %397 = vmatprep.subr.mxu0 0.0
        %398 = vmatpush1.msra.mxu0 0.0
        %399 = vmatprep.mubr.f32.mxu0 0.0
        %400 = vmatmul.mubr.f32.gmra.mrb[0].mxu0 %v329
        %v401 = vpop.f32.mrb[0].mxu0
        %v402 = vadd.f32 0.0, %v401
        %v403 = vpop.f32.mrb[0].mxu0
        %404 = vdwg.mxu0
        %v405 = vxor.u32 %v402, 2147483648
        %v406 = vmul.f32 %v405, 1.442695
        %v407 = vpow.pop %v406
        %v408 = vadd.f32 %v407, 1.0
        %v409 = vrcp.pop %v408
        %v410 = vmul.f32 1.0, %v409
        %v411 = vlaneseq
        %v412 = vshrl.u32 %v411, 7
        %v413 = vsub.s32 0, %v412
        %v414 = vrot.slane %v410, %v413
        %416 = vbcast.lane.b32.xlu0 %v414, 256
        %v417 = vpop.permute.xlu0 %416
        %s419 = sor.u32 256, 8
        %420 = vbcast.lane.b32.xlu0 %v414, %s419
        %v421 = vpop.permute.xlu0 %420
        %s423 = sor.u32 256, 16
        %424 = vbcast.lane.b32.xlu0 %v414, %s423
        %v425 = vpop.permute.xlu0 %424
        %s427 = sor.u32 256, 24
        %428 = vbcast.lane.b32.xlu0 %v414, %s427
        %v429 = vpop.permute.xlu0 %428
        %v430 = vmul.f32 %v189, %v417
        %v431 = vmul.f32 %v190, %v417
        %v432 = vmul.f32 %v191, %v421
        %v433 = vmul.f32 %v192, %v421
        %v434 = vmul.f32 %v193, %v425
        %v435 = vmul.f32 %v194, %v425
        %v436 = vmul.f32 %v195, %v429
        %v437 = vmul.f32 %v196, %v429
        %438 = vst [vmem:[%s188] sm:$0xff] %v430
        %439 = vst [vmem:[%s188 + $0x8] sm:$0xff] %v431
        %440 = vst [vmem:[%s188 + $0x10] sm:$0xff] %v432
        %441 = vst [vmem:[%s188 + $0x18] sm:$0xff] %v433
        %442 = vst [vmem:[%s188 + $0x20] sm:$0xff] %v434
        %443 = vst [vmem:[%s188 + $0x28] sm:$0xff] %v435
        %444 = vst [vmem:[%s188 + $0x30] sm:$0xff] %v436
        %445 = vst [vmem:[%s188 + $0x38] sm:$0xff] %v437
        %s446 = sand.u32 %s96, 1
        %s447 = scalar_lea.sflag [#allocation4], %s446
        %s448 = sand.u32 %s96, 1
        %s449 = smul.addr %s448, 64
        %s450 = scalar_lea.vmem [#allocation5], %s449
        // Predicated region
        $region37: #{tpu_custom_call.1} parent=31 // pred_check
          %p451 = pneg %p106
        $region38: #{tpu_custom_call.1} parent=31 // pred_check_branch
          %453 = sbr.rel (%p451) target = $region40
        $region39: #{tpu_custom_call.1} parent=31 // pred_region
          %s455 = ssub.s32 1024, 1024
          %456 = vsyncadd %s447, %s455
          %s457 = smul.addr %s20, 8
          %s458 = smul.addr %s457, 128
          %s459 = scalar_lea.hbm %s3, %s458
          %s460 = sshll.u32 %s450, 4
          %s461 = int_to_ptr.vmem [resolvable:$true] %s460
          %466 = dma.vmem_to_hbm [thread:$0]  %s461, 1024, %s459, %s447, 256, 256, 16
        $region40: #{tpu_custom_call.1} parent=31 // pred_fallthru
          _
      $region32: #{tpu_custom_call.1} parent=5 // pred_fallthru
        _
      %p467 = scmp.le.s32.totalorder 2, %s15
      // Predicated region
      $region41: #{tpu_custom_call.1} parent=5 // pred_check
        %p468 = pneg %p467
      $region42: #{tpu_custom_call.1} parent=5 // pred_check_branch
        %470 = sbr.rel (%p468) target = $region44
      $region43: #{tpu_custom_call.1} parent=5 // pred_region
        %s471 = ssub.s32 %s15, 2
        // Predicated region
        $region45: #{tpu_custom_call.1} parent=43 // pred_check
          %p472 = pneg %p112
        $region46: #{tpu_custom_call.1} parent=43 // pred_check_branch
          %474 = sbr.rel (%p472) target = $region48
        $region47: #{tpu_custom_call.1} parent=43 // pred_region
          %s475 = sand.u32 %s97, 1
          %s476 = scalar_lea.sflag [#allocation4], %s475
          %s477 = sand.u32 %s97, 1
          %s478 = smul.addr %s477, 64
          %s479 = scalar_lea.vmem [#allocation5], %s478
          %480 = dma.done %s476, 1024
        $region48: #{tpu_custom_call.1} parent=43 // pred_fallthru
          _
      $region44: #{tpu_custom_call.1} parent=5 // pred_fallthru
        _
    $region6: #{tpu_custom_call.1} parent=1 // loop_footer
      %s19 = sadd.s32 1, %s15
    $region7: #{tpu_custom_call.1} parent=1 // loop_footer_branch
      %14 = sbr.rel target = $region3
    $region8: #{tpu_custom_call.1} parent=1 // loop_exit
      _
    %481 = vsyncpa [#allocation3], 1
    %s482 = scalar_lea.sflag [#allocation3], 1
    %483 = vsyncpa %s482, 1
    %484 = vsyncpa [#allocation4], 1
    %s485 = scalar_lea.sflag [#allocation4], 1
    %486 = vsyncpa %s485, 1

</llo_original>
